<compile_context>
chip_gen: v5e
topology: v5e:2x2
jax: 0.10.0
libtpu: 0.0.40
codegen_flags: <defaults>
</compile_context>

<pallas_src>
import functools
import math

import jax
import jax.numpy as jnp
from jax.experimental import pallas as pl
from jax.experimental.pallas import tpu as pltpu


# ----------------------------- small helpers -----------------------------

def _round_up(x, m):
    return ((x + m - 1) // m) * m


def _choose_tile(dim, target, base):
    """Return (tile, padded_dim) with tile | padded_dim and tile % base == 0."""
    if dim >= target:
        return target, _round_up(dim, target)
    t = _round_up(dim, base)
    return t, t


def _pad_to(x, shape, value=0):
    pads = [(0, s - d) for d, s in zip(x.shape, shape)]
    if all(p == (0, 0) for p in pads):
        return x
    return jnp.pad(x, pads, constant_values=value)


def _seq_tile(L):
    """Sequence tile: single tile for short sequences, 128-wide tiles otherwise."""
    if L >= 128:
        return 128, _round_up(L, 128)
    t = _round_up(L, 8)
    return t, t


# ----------------------------- tiled linear (matmul + bias + act + residual) -----------------------------

def _linear_kernel(x_ref, w_ref, b_ref, *rest, act, has_res):
    if has_res:
        r_ref, o_ref, acc_ref = rest
    else:
        o_ref, acc_ref = rest

    k = pl.program_id(2)

    @pl.when(k == 0)
    def _():
        acc_ref[...] = jnp.zeros_like(acc_ref)

    acc_ref[...] += jnp.dot(x_ref[...], w_ref[...],
                            preferred_element_type=jnp.float32)

    @pl.when(k == pl.num_programs(2) - 1)
    def _():
        y = acc_ref[...] + b_ref[...]
        if act == "gelu":
            # TODO(synk): reference BERT/ViT uses exact erf-GELU; tanh approximation is
            # used here for guaranteed Mosaic lowering.
            y = jax.nn.gelu(y, approximate=True)
        if has_res:
            y = y + r_ref[...].astype(jnp.float32)
        o_ref[...] = y.astype(o_ref.dtype)


@functools.lru_cache(maxsize=None)
def _build_linear_call(Mp, Kp, Np_, tm, tk, tn, act, has_res, out_dtype):
    kernel = functools.partial(_linear_kernel, act=act, has_res=has_res)
    in_specs = [
        pl.BlockSpec((tm, tk), lambda i, j, k: (i, k)),
        pl.BlockSpec((tk, tn), lambda i, j, k: (k, j)),
        pl.BlockSpec((1, tn), lambda i, j, k: (0, j)),
    ]
    if has_res:
        in_specs.append(pl.BlockSpec((tm, tn), lambda i, j, k: (i, j)))
    return jax.jit(pl.pallas_call(
        kernel,
        grid=(Mp // tm, Np_ // tn, Kp // tk),
        out_shape=jax.ShapeDtypeStruct((Mp, Np_), out_dtype),
        in_specs=in_specs,
        out_specs=pl.BlockSpec((tm, tn), lambda i, j, k: (i, j)),
        scratch_shapes=[pltpu.VMEM((tm, tn), jnp.float32)],
        compiler_params=pltpu.CompilerParams(
            dimension_semantics=("parallel", "parallel", "arbitrary"),
            vmem_limit_bytes=32 * 1024 * 1024),
    ))


def pallas_linear(x, w, b, act=None, residual=None, out_dtype=jnp.bfloat16):
    """y = act(x @ w + b) (+ residual); bf16 MXU matmul with f32 accumulation."""
    lead = x.shape[:-1]
    K = x.shape[-1]
    N = w.shape[-1]
    x2 = x.reshape(-1, K).astype(jnp.bfloat16)
    M = x2.shape[0]

    # 512-wide tiles (MXU-full on v6e/v7x, ~5 MiB double-buffered working set).
    tm, Mp = _choose_tile(M, 512, 16)
    tn, Np_ = _choose_tile(N, 512, 128)
    tk, Kp = _choose_tile(K, 512, 128)

    x2 = _pad_to(x2, (Mp, Kp))
    wp = _pad_to(w.astype(jnp.bfloat16), (Kp, Np_))
    bp = _pad_to(b.astype(jnp.float32).reshape(1, N), (1, Np_))

    args = [x2, wp, bp]
    has_res = residual is not None
    if has_res:
        args.append(_pad_to(residual.reshape(-1, N).astype(jnp.bfloat16), (Mp, Np_)))

    call = _build_linear_call(Mp, Kp, Np_, tm, tk, tn, act, has_res, out_dtype)
    out = call(*args)
    return out[:M, :N].reshape(*lead, N)


def xla_linear(x, w, b):
    """Tiny-M projection heads (M = batch): plain XLA dot avoids padding M to a dead tile."""
    return jnp.dot(x.astype(jnp.float32), w.astype(jnp.float32),
                   preferred_element_type=jnp.float32) + b.astype(jnp.float32)


# ----------------------------- (residual +) LayerNorm -----------------------------

def _ln_kernel(*refs, eps, has_res):
    if has_res:
        x_ref, r_ref, g_ref, b_ref, o_ref = refs
    else:
        x_ref, g_ref, b_ref, o_ref = refs
    x = x_ref[...].astype(jnp.float32)
    if has_res:
        x = x + r_ref[...].astype(jnp.float32)
    mu = jnp.mean(x, axis=-1, keepdims=True)
    var = jnp.mean(jnp.square(x - mu), axis=-1, keepdims=True)
    y = (x - mu) * jax.lax.rsqrt(var + eps)
    o_ref[...] = (y * g_ref[...] + b_ref[...]).astype(o_ref.dtype)


@functools.lru_cache(maxsize=None)
def _build_ln_call(Mp, tm, D, eps, has_res, out_dtype):
    kernel = functools.partial(_ln_kernel, eps=eps, has_res=has_res)
    in_specs = [pl.BlockSpec((tm, D), lambda i: (i, 0))]
    if has_res:
        in_specs.append(pl.BlockSpec((tm, D), lambda i: (i, 0)))
    in_specs += [pl.BlockSpec((1, D), lambda i: (0, 0)),
                 pl.BlockSpec((1, D), lambda i: (0, 0))]
    return jax.jit(pl.pallas_call(
        kernel,
        grid=(Mp // tm,),
        out_shape=jax.ShapeDtypeStruct((Mp, D), out_dtype),
        in_specs=in_specs,
        out_specs=pl.BlockSpec((tm, D), lambda i: (i, 0)),
        compiler_params=pltpu.CompilerParams(dimension_semantics=("parallel",)),
    ))


def pallas_layernorm(x, g, b, eps=1e-6, residual=None, out_dtype=jnp.bfloat16):
    lead = x.shape[:-1]
    D = x.shape[-1]
    x2 = x.reshape(-1, D).astype(jnp.bfloat16)
    M = x2.shape[0]
    tm, Mp = _choose_tile(M, 512, 16)
    x2 = _pad_to(x2, (Mp, D))

    args = [x2]
    has_res = residual is not None
    if has_res:
        args.append(_pad_to(residual.reshape(-1, D).astype(jnp.bfloat16), (Mp, D)))
    args += [g.reshape(1, D).astype(jnp.float32), b.reshape(1, D).astype(jnp.float32)]

    call = _build_ln_call(Mp, tm, D, float(eps), has_res, out_dtype)
    out = call(*args)
    return out[:M].reshape(*lead, D)


# ----------------------------- flash attention (heads read in-kernel from fused QKV) -----------------------------

def _flash_attn_kernel(q_ref, k_ref, v_ref, bias_ref, o_ref,
                       m_sc, l_sc, acc_sc, *, scale, causal, heads, dh, tq, tk):
    qi = pl.program_id(1)
    ki = pl.program_id(2)

    @pl.when(ki == 0)
    def _():
        m_sc[...] = jnp.full_like(m_sc, -1e30)
        l_sc[...] = jnp.zeros_like(l_sc)
        acc_sc[...] = jnp.zeros_like(acc_sc)

    def compute():
        q = q_ref[0]                       # (tq, D) bf16
        k = k_ref[0]                       # (tk, D) bf16
        v = v_ref[0]                       # (tk, D) bf16
        bias = bias_ref[0]                 # (1, tk) f32, key padding (additive)
        if causal:
            qpos = qi * tq + jax.lax.broadcasted_iota(jnp.int32, (tq, tk), 0)
            kpos = ki * tk + jax.lax.broadcasted_iota(jnp.int32, (tq, tk), 1)
            cbias = jnp.where(kpos <= qpos, 0.0, -1e30).astype(jnp.float32)
        for h in range(heads):
            sl = slice(h * dh, (h + 1) * dh)
            hs = slice(h, h + 1)
            s = jax.lax.dot_general(
                q[:, sl], k[:, sl],
                dimension_numbers=(((1,), (1,)), ((), ())),
                preferred_element_type=jnp.float32) * scale
            s = s + bias
            if causal:
                s = s + cbias
            m_prev = m_sc[:, hs]
            m_new = jnp.maximum(m_prev, jnp.max(s, axis=-1, keepdims=True))
            alpha = jnp.exp(m_prev - m_new)
            p = jnp.exp(s - m_new)
            l_sc[:, hs] = alpha * l_sc[:, hs] + jnp.sum(p, axis=-1, keepdims=True)
            acc_sc[:, sl] = alpha * acc_sc[:, sl] + jnp.dot(
                p.astype(v.dtype), v[:, sl], preferred_element_type=jnp.float32)
            m_sc[:, hs] = m_new

    if causal:
        @pl.when(ki * tk <= qi * tq + (tq - 1))
        def _():
            compute()
    else:
        compute()

    @pl.when(ki == pl.num_programs(2) - 1)
    def _():
        for h in range(heads):
            sl = slice(h * dh, (h + 1) * dh)
            inv = pl.reciprocal(l_sc[:, h:h + 1], approx=True)
            o_ref[0, :, sl] = (acc_sc[:, sl] * inv).astype(o_ref.dtype)


def _q_map(c):
    return lambda b, qi, ki: (b, qi, c)


def _kv_map(c):
    return lambda b, qi, ki: (b, ki, c)


def _bias_map(b, qi, ki):
    return (b, 0, ki)


def _out_map(b, qi, ki):
    return (b, qi, 0)


@functools.lru_cache(maxsize=None)
def _build_flash_call(B, Lqp, Lkp, D, H, causal, q_chan, k_chan, v_chan, tq, tk, scale):
    dh = D // H
    kernel = functools.partial(_flash_attn_kernel, scale=scale, causal=causal,
                               heads=H, dh=dh, tq=tq, tk=tk)
    grid = (B, Lqp // tq, Lkp // tk)
    return jax.jit(pl.pallas_call(
        kernel,
        grid=grid,
        out_shape=jax.ShapeDtypeStruct((B, Lqp, D), jnp.bfloat16),
        in_specs=[
            pl.BlockSpec((1, tq, D), _q_map(q_chan)),
            pl.BlockSpec((1, tk, D), _kv_map(k_chan)),
            pl.BlockSpec((1, tk, D), _kv_map(v_chan)),
            pl.BlockSpec((1, 1, tk), _bias_map),
        ],
        out_specs=pl.BlockSpec((1, tq, D), _out_map),
        scratch_shapes=[
            pltpu.VMEM((tq, H), jnp.float32),
            pltpu.VMEM((tq, H), jnp.float32),
            pltpu.VMEM((tq, D), jnp.float32),
        ],
        compiler_params=pltpu.CompilerParams(
            dimension_semantics=("parallel", "parallel", "arbitrary"),
            vmem_limit_bytes=32 * 1024 * 1024),
    ))


def _attn_bias(key_mask, Lkp):
    """Additive key-padding bias (B, 1, Lkp): 0 for valid keys, -1e9 for masked/padded."""
    B, _ = key_mask.shape
    m = _pad_to(key_mask.astype(jnp.float32), (B, Lkp))
    return jnp.where(m > 0.5, 0.0, -1e9).astype(jnp.float32).reshape(B, 1, Lkp)


# ----------------------------- attention wrappers -----------------------------

def mha_self(x, p, H, key_mask, causal, residual=None):
    B, L, D = x.shape
    assert D % 128 == 0 and D % H == 0
    qkv = pallas_linear(x, p["wqkv"], p["bqkv"])            # fused QKV (B, L, 3D)
    t, Lp = _seq_tile(L)
    qkv = _pad_to(qkv, (B, Lp, 3 * D))
    bias = _attn_bias(key_mask, Lp)
    call = _build_flash_call(B, Lp, Lp, D, H, causal, 0, 1, 2, t, t,
                             1.0 / math.sqrt(D // H))
    o = call(qkv, qkv, qkv, bias)[:, :L, :]                 # merged (B, L, D) layout
    return pallas_linear(o, p["wo"], p["bo"], residual=residual)


def mha_cross(xq, xkv, p, H, enc_mask, residual=None):
    B, Lq, D = xq.shape
    Lk = xkv.shape[1]
    assert D % 128 == 0 and D % H == 0
    q = pallas_linear(xq, p["wq"], p["bq"])                  # (B, Lq, D)
    kv = pallas_linear(xkv, p["wkv"], p["bkv"])              # fused KV (B, Lk, 2D)
    tq, Lqp = _seq_tile(Lq)
    tk, Lkp = _seq_tile(Lk)
    q = _pad_to(q, (B, Lqp, D))
    kv = _pad_to(kv, (B, Lkp, 2 * D))
    bias = _attn_bias(enc_mask, Lkp)
    call = _build_flash_call(B, Lqp, Lkp, D, H, False, 0, 0, 1, tq, tk,
                             1.0 / math.sqrt(D // H))
    o = call(q, kv, kv, bias)[:, :Lq, :]
    return pallas_linear(o, p["wo"], p["bo"], residual=residual)


# ----------------------------- fused MLM decode + cross entropy -----------------------------

def _mlm_loss_kernel(h_ref, w_ref, b_ref, lab_ref, nll_ref, valid_ref,
                     m_sc, l_sc, pick_sc, *, tv, vocab):
    v = pl.program_id(0)        # vocab tile (outer, reduction)
    i = pl.program_id(1)        # row block (inner, parallel)

    @pl.when(v == 0)
    def _():
        m_sc[i] = jnp.full(m_sc.shape[1:], -1e30, jnp.float32)
        l_sc[i] = jnp.zeros(l_sc.shape[1:], jnp.float32)
        pick_sc[i] = jnp.zeros(pick_sc.shape[1:], jnp.float32)

    logits = jnp.dot(h_ref[...], w_ref[...],
                     preferred_element_type=jnp.float32) + b_ref[...]     # (tm, tv)
    col = v * tv + jax.lax.broadcasted_iota(jnp.int32, logits.shape, 1)
    logits = jnp.where(col < vocab, logits, -1e30)                        # mask padded cols
    labels = lab_ref[...]                                                 # (tm, 1) int32

    pick_sc[i] = pick_sc[i] + jnp.sum(jnp.where(col == labels, logits, 0.0),
                                      axis=-1, keepdims=True)
    m_prev = m_sc[i]
    m_new = jnp.maximum(m_prev, jnp.max(logits, axis=-1, keepdims=True))
    l_sc[i] = l_sc[i] * jnp.exp(m_prev - m_new) + \
        jnp.sum(jnp.exp(logits - m_new), axis=-1, keepdims=True)
    m_sc[i] = m_new

    @pl.when(v == pl.num_programs(0) - 1)
    def _():
        lse = m_sc[i] + jnp.log(l_sc[i])
        valid = (labels >= 0).astype(jnp.float32)
        nll_ref[...] = (lse - pick_sc[i]) * valid
        valid_ref[...] = valid


@functools.lru_cache(maxsize=None)
def _build_mlm_call(Np_, D, Vp, tm, tv, vocab):
    nb = Np_ // tm
    kernel = functools.partial(_mlm_loss_kernel, tv=tv, vocab=vocab)
    return jax.jit(pl.pallas_call(
        kernel,
        # vocab outer (reduction) / rows inner: decoder weight tile stays resident and
        # the (D x V) weights stream from HBM exactly once.
        grid=(Vp // tv, nb),
        out_shape=(jax.ShapeDtypeStruct((Np_, 1), jnp.float32),
                   jax.ShapeDtypeStruct((Np_, 1), jnp.float32)),
        in_specs=[
            pl.BlockSpec((tm, D), lambda v, i: (i, 0)),
            pl.BlockSpec((D, tv), lambda v, i: (0, v)),
            pl.BlockSpec((1, tv), lambda v, i: (0, v)),
            pl.BlockSpec((tm, 1), lambda v, i: (i, 0)),
        ],
        out_specs=(pl.BlockSpec((tm, 1), lambda v, i: (i, 0)),
                   pl.BlockSpec((tm, 1), lambda v, i: (i, 0))),
        scratch_shapes=[
            pltpu.VMEM((nb, tm, 1), jnp.float32),
            pltpu.VMEM((nb, tm, 1), jnp.float32),
            pltpu.VMEM((nb, tm, 1), jnp.float32),
        ],
        compiler_params=pltpu.CompilerParams(
            dimension_semantics=("arbitrary", "parallel"),
            vmem_limit_bytes=32 * 1024 * 1024),
    ))


def fused_mlm_loss(h, w_dec, b_dec, labels):
    """CrossEntropy(h @ w_dec + b_dec, labels), ignore_index=-100; logits never hit HBM."""
    # TODO(synk): exact dynamic gathering of only masked rows (labels != -100) needs
    # dynamic shapes; with static shapes all rows are decoded (weights stream once).
    N, D = h.shape
    V = w_dec.shape[1]

    tm, Np_ = _choose_tile(N, 256, 16)
    tv, Vp = _choose_tile(V, 1024, 128)

    hp = _pad_to(h.astype(jnp.bfloat16), (Np_, D))
    wp = _pad_to(w_dec.astype(jnp.bfloat16), (D, Vp))
    bp = _pad_to(b_dec.astype(jnp.float32).reshape(1, V), (1, Vp))
    lab = _pad_to(labels.astype(jnp.int32).reshape(N, 1), (Np_, 1), value=-100)

    call = _build_mlm_call(Np_, D, Vp, tm, tv, V)
    nll, valid = call(hp, wp, bp, lab)
    nll = nll[:N, 0]
    valid = valid[:N, 0]
    return jnp.sum(nll) / jnp.maximum(jnp.sum(valid), 1.0)


# ----------------------------- ITA contrastive loss (tiny B x B, plain XLA) -----------------------------

def ita_loss(image_feat, text_feat, temp):
    sim_i2t = jnp.dot(image_feat, text_feat.T) / temp
    sim_t2i = sim_i2t.T

    def nll(s):
        logp = jax.nn.log_softmax(s, axis=-1)
        return -jnp.mean(jnp.diagonal(logp))

    return 0.5 * (nll(sim_i2t) + nll(sim_t2i))


# ----------------------------- model building blocks -----------------------------

def l2norm(x, eps=1e-12):
    return x / jnp.maximum(jnp.linalg.norm(x, axis=-1, keepdims=True), eps)


def vit_forward(p, image, cfg):
    B, C, H, W = image.shape
    P, Dv = cfg["patch"], cfg["Dv"]
    nh, nw = H // P, W // P
    # Conv2d(3, Dv, kernel=P, stride=P) as a patch matmul: flatten order (c, ph, pw).
    patches = image.reshape(B, C, nh, P, nw, P).transpose(0, 2, 4, 1, 3, 5)
    patches = patches.reshape(B, nh * nw, C * P * P)
    x = pallas_linear(patches, p["patch_w"], p["patch_b"])                # (B, Np, Dv)
    cls = jnp.broadcast_to(p["cls"].astype(jnp.bfloat16), (B, 1, Dv))
    x = jnp.concatenate([cls, x], axis=1) + p["pos"].astype(jnp.bfloat16)
    Lv = x.shape[1]
    ones_mask = jnp.ones((B, Lv), jnp.float32)
    for blk in p["blocks"]:
        h = pallas_layernorm(x, blk["ln1_g"], blk["ln1_b"], eps=1e-6)
        x = mha_self(h, blk["attn"], cfg["vit_heads"], ones_mask, causal=False,
                     residual=x)                                          # residual fused in wo
        h = pallas_layernorm(x, blk["ln2_g"], blk["ln2_b"], eps=1e-6)
        h = pallas_linear(h, blk["fc1_w"], blk["fc1_b"], act="gelu")
        x = pallas_linear(h, blk["fc2_w"], blk["fc2_b"], residual=x)      # residual fused in fc2
    return pallas_layernorm(x, p["norm_g"], p["norm_b"], eps=1e-6)


def bert_embed(p, ids):
    x = jnp.take(p["tok_emb"], ids, axis=0) + p["pos_emb"][: ids.shape[1]][None]
    return pallas_layernorm(x, p["emb_ln_g"], p["emb_ln_b"], eps=1e-12)


def bert_self_block(x, blk, H, key_mask, causal):
    a = mha_self(x, blk["attn"], H, key_mask, causal)
    x = pallas_layernorm(a, blk["ln1_g"], blk["ln1_b"], eps=1e-12, residual=x)  # fused add+LN
    h = pallas_linear(x, blk["fc1_w"], blk["fc1_b"], act="gelu")
    h = pallas_linear(h, blk["fc2_w"], blk["fc2_b"])
    return pallas_layernorm(h, blk["ln2_g"], blk["ln2_b"], eps=1e-12, residual=x)


def bert_fusion_block(x, blk, H, key_mask, causal, enc, enc_mask):
    a = mha_self(x, blk["attn"], H, key_mask, causal)
    x = pallas_layernorm(a, blk["ln1_g"], blk["ln1_b"], eps=1e-12, residual=x)
    a = mha_cross(x, enc, blk["xattn"], H, enc_mask)
    x = pallas_layernorm(a, blk["lnx_g"], blk["lnx_b"], eps=1e-12, residual=x)
    h = pallas_linear(x, blk["fc1_w"], blk["fc1_b"], act="gelu")
    h = pallas_linear(h, blk["fc2_w"], blk["fc2_b"])
    return pallas_layernorm(h, blk["ln2_g"], blk["ln2_b"], eps=1e-12, residual=x)


def mlm_mask(key, input_ids, cfg):
    """Mirror of ALBEF.mask() with deterministic jax.random draws."""
    k1, k2, k3, k4 = jax.random.split(key, 4)
    masked = jax.random.bernoulli(k1, cfg["mlm_prob"], input_ids.shape)
    masked = masked & (input_ids != cfg["pad_id"]) & (input_ids != cfg["cls_id"])
    labels = jnp.where(masked, input_ids, -100)
    replaced = jax.random.bernoulli(k2, 0.8, input_ids.shape) & masked
    ids = jnp.where(replaced, cfg["mask_id"], input_ids)
    rand = jax.random.bernoulli(k3, 0.5, input_ids.shape) & masked & (~replaced)
    random_words = jax.random.randint(k4, input_ids.shape, 0, cfg["vocab"])
    ids = jnp.where(rand, random_words, ids)
    return ids, labels


# ----------------------------- ALBEF forward (generation/bert branch) -----------------------------

def albef_forward(params, image, input_ids, attention_mask, key, alpha=0.0):
    cfg = params["cfg"]
    temp = jnp.clip(params["temp"], 0.001, 0.5)

    # --- vision encoder + projection ---
    image_embeds = vit_forward(params["visual"], image, cfg)               # (B, Lv, Dv) bf16
    image_feat = l2norm(xla_linear(image_embeds[:, 0, :],
                                   params["vision_proj"]["w"],
                                   params["vision_proj"]["b"]))            # (B, E)

    # --- MLM masking of input ids ---
    ids_masked, labels = mlm_mask(key, input_ids, cfg)

    # --- text-mode (causal, is_decoder=True) BERT encoder ---
    tp = params["text"]
    H = cfg["text_heads"]
    key_mask = attention_mask.astype(jnp.float32)                          # (B, Lt)
    x = bert_embed(tp, ids_masked)
    for blk in tp["text_layers"]:
        x = bert_self_block(x, blk, H, key_mask, causal=True)
    text_embeds = x                                                        # (B, Lt, Dt)

    # attention-mask-weighted pooling + text projection (as in the generation branch)
    m = attention_mask.astype(jnp.float32)
    pooled = jnp.sum(text_embeds.astype(jnp.float32) * m[:, :, None], axis=1) \
        / jnp.sum(m, axis=-1, keepdims=True)
    text_feat = l2norm(xla_linear(pooled, params["text_proj"]["w"],
                                  params["text_proj"]["b"]))

    # --- fusion layers (cross-attention to image) + fused MLM decode/loss ---
    B, Lt = input_ids.shape
    Lv = image_embeds.shape[1]
    img_mask = jnp.ones((B, Lv), jnp.float32)                              # image_atts = ones
    for blk in tp["fusion_layers"]:
        x = bert_fusion_block(x, blk, H, key_mask, True, image_embeds, img_mask)

    h = pallas_linear(x, tp["mlm_dense_w"], tp["mlm_dense_b"], act="gelu")
    h = pallas_layernorm(h, tp["mlm_ln_g"], tp["mlm_ln_b"], eps=1e-12)
    loss_mlm = fused_mlm_loss(h.reshape(-1, cfg["Dt"]),
                              tp["mlm_dec_w"], tp["mlm_dec_b"], labels.reshape(-1))

    # --- ITA contrastive loss (diagonal targets; no queue/momentum in this branch) ---
    loss_ita = ita_loss(image_feat, text_feat, temp)
    loss_itm = jnp.zeros_like(loss_ita)
    return loss_mlm, loss_ita, loss_itm


# ----------------------------- parameter init -----------------------------

class KeyGen:
    def __init__(self, key):
        self.key = key

    def __call__(self):
        self.key, k = jax.random.split(self.key)
        return k


def _normal(kg, shape, std=0.02):
    return std * jax.random.normal(kg(), shape, jnp.float32)


def _w(kg, shape):
    return _normal(kg, shape).astype(jnp.bfloat16)


def _self_attn_params(kg, d):
    return dict(
        wqkv=_w(kg, (d, 3 * d)), bqkv=jnp.zeros((3 * d,), jnp.float32),
        wo=_w(kg, (d, d)), bo=jnp.zeros((d,), jnp.float32),
    )


def _cross_attn_params(kg, dq, dkv, d):
    return dict(
        wq=_w(kg, (dq, d)), bq=jnp.zeros((d,), jnp.float32),
        wkv=_w(kg, (dkv, 2 * d)), bkv=jnp.zeros((2 * d,), jnp.float32),
        wo=_w(kg, (d, d)), bo=jnp.zeros((d,), jnp.float32),
    )


def init_params(cfg, seed=0):
    kg = KeyGen(jax.random.PRNGKey(seed))
    C, P, Dv, Dt, V, E = cfg["C"], cfg["patch"], cfg["Dv"], cfg["Dt"], cfg["vocab"], cfg["E"]
    Np = (cfg["img"] // P) ** 2
    hid_v = Dv * cfg["mlp_ratio"]
    hid_t = Dt * cfg["mlp_ratio"]

    def ln(d):
        return jnp.ones((d,), jnp.float32), jnp.zeros((d,), jnp.float32)

    vit_blocks = []
    for _ in range(cfg["vit_depth"]):
        g1, b1 = ln(Dv)
        g2, b2 = ln(Dv)
        vit_blocks.append(dict(
            ln1_g=g1, ln1_b=b1, attn=_self_attn_params(kg, Dv),
            ln2_g=g2, ln2_b=b2,
            fc1_w=_w(kg, (Dv, hid_v)), fc1_b=jnp.zeros((hid_v,), jnp.float32),
            fc2_w=_w(kg, (hid_v, Dv)), fc2_b=jnp.zeros((Dv,), jnp.float32),
        ))
    ng, nb = ln(Dv)
    visual = dict(
        patch_w=_w(kg, (C * P * P, Dv)), patch_b=jnp.zeros((Dv,), jnp.float32),
        cls=_w(kg, (1, 1, Dv)), pos=_w(kg, (1, Np + 1, Dv)),
        blocks=vit_blocks, norm_g=ng, norm_b=nb,
    )

    eg, eb = ln(Dt)
    text_layers, fusion_layers = [], []
    for _ in range(cfg["text_layers"]):
        g1, b1 = ln(Dt)
        g2, b2 = ln(Dt)
        text_layers.append(dict(
            attn=_self_attn_params(kg, Dt), ln1_g=g1, ln1_b=b1,
            fc1_w=_w(kg, (Dt, hid_t)), fc1_b=jnp.zeros((hid_t,), jnp.float32),
            fc2_w=_w(kg, (hid_t, Dt)), fc2_b=jnp.zeros((Dt,), jnp.float32),
            ln2_g=g2, ln2_b=b2,
        ))
    for _ in range(cfg["fusion_layers"]):
        g1, b1 = ln(Dt)
        gx, bx = ln(Dt)
        g2, b2 = ln(Dt)
        fusion_layers.append(dict(
            attn=_self_attn_params(kg, Dt), ln1_g=g1, ln1_b=b1,
            xattn=_cross_attn_params(kg, Dt, Dv, Dt), lnx_g=gx, lnx_b=bx,
            fc1_w=_w(kg, (Dt, hid_t)), fc1_b=jnp.zeros((hid_t,), jnp.float32),
            fc2_w=_w(kg, (hid_t, Dt)), fc2_b=jnp.zeros((Dt,), jnp.float32),
            ln2_g=g2, ln2_b=b2,
        ))
    mg, mb = ln(Dt)
    text = dict(
        tok_emb=_w(kg, (V, Dt)), pos_emb=_w(kg, (cfg["Lmax"], Dt)),
        emb_ln_g=eg, emb_ln_b=eb,
        text_layers=text_layers, fusion_layers=fusion_layers,
        mlm_dense_w=_w(kg, (Dt, Dt)), mlm_dense_b=jnp.zeros((Dt,), jnp.float32),
        mlm_ln_g=mg, mlm_ln_b=mb,
        mlm_dec_w=_w(kg, (Dt, V)), mlm_dec_b=jnp.zeros((V,), jnp.float32),
    )

    return dict(
        cfg=cfg,
        visual=visual,
        text=text,
        vision_proj=dict(w=_w(kg, (Dv, E)), b=jnp.zeros((E,), jnp.float32)),
        text_proj=dict(w=_w(kg, (Dt, E)), b=jnp.zeros((E,), jnp.float32)),
        temp=jnp.array(cfg["temp"], jnp.float32),
    )


# ----------------------------- main -----------------------------

if __name__ == "__main__":
    # Small but layout-realistic shapes: D = 128 (lane-dense), head_dim = 64 (as prod).
    cfg = dict(
        B=2, C=3, img=16, patch=4, Dv=128, vit_depth=2, vit_heads=2,
        Dt=128, text_layers=2, fusion_layers=2, text_heads=2,
        vocab=128, Lt=8, Lmax=16, E=32, mlp_ratio=4,
        mlm_prob=0.15, pad_id=0, cls_id=1, mask_id=2, temp=0.07,
    )
    params = init_params(cfg, seed=0)

    key = jax.random.PRNGKey(0)
    k_img, k_ids, k_mlm = jax.random.split(key, 3)
    image = jax.random.normal(k_img, (cfg["B"], cfg["C"], cfg["img"], cfg["img"]), jnp.float32)
    input_ids = jax.random.randint(k_ids, (cfg["B"], cfg["Lt"]), 3, cfg["vocab"])
    input_ids = input_ids.at[:, 0].set(cfg["cls_id"])
    attention_mask = jnp.ones((cfg["B"], cfg["Lt"]), jnp.int32)
    # pad the tail of the second example
    input_ids = input_ids.at[1, 6:].set(cfg["pad_id"])
    attention_mask = attention_mask.at[1, 6:].set(0)

    loss_mlm, loss_ita, loss_itm = albef_forward(params, image, input_ids, attention_mask, k_mlm)
    jax.block_until_ready((loss_mlm, loss_ita, loss_itm))
    assert jnp.isfinite(loss_mlm) and jnp.isfinite(loss_ita) and jnp.isfinite(loss_itm)
    print("KERNEL_OK")
</pallas_src>

<mosaic_0001>
module attributes {stable_mosaic.version = 11 : i64} {
  func.func @_linear_kernel(%arg0: i32, %arg1: i32, %arg2: i32, %arg3: memref<32x128xbf16, #tpu.memory_space<vmem>>, %arg4: memref<128x128xbf16, #tpu.memory_space<vmem>>, %arg5: memref<1x128xf32, #tpu.memory_space<vmem>>, %arg6: memref<32x128xbf16, #tpu.memory_space<vmem>>, %arg7: memref<32x128xf32, #tpu.memory_space<vmem>>) attributes {dimension_semantics = [#tpu.dimension_semantics<parallel>, #tpu.dimension_semantics<parallel>, #tpu.dimension_semantics<arbitrary>], iteration_bounds = array<i64: 1, 1, 1>, scalar_prefetch = 0 : i64, scratch_operands = 1 : i64, tpu.core_type = #tpu.core_type<tc>, window_params = [{transform_indices = @transform_0, window_bounds = array<i64: 32, 128>}, {transform_indices = @transform_1, window_bounds = array<i64: 128, 128>}, {transform_indices = @transform_2, window_bounds = array<i64: 1, 128>}, {transform_indices = @transform_3, window_bounds = array<i64: 32, 128>}]} {
    %c0_i32 = arith.constant 0 : i32
    %0 = arith.cmpi eq, %arg2, %c0_i32 : i32
    %1 = arith.extui %0 : i1 to i32
    %c0_i32_0 = arith.constant 0 : i32
    %2 = arith.cmpi ne, %1, %c0_i32_0 : i32
    scf.if %2 {
      %cst_10 = arith.constant 0.000000e+00 : f32
      %12 = vector.broadcast %cst_10 : f32 to vector<32x128xf32>
      %c0_11 = arith.constant 0 : index
      %c0_12 = arith.constant 0 : index
      %13 = vector.load %arg7[%c0_11, %c0_12] : memref<32x128xf32, #tpu.memory_space<vmem>>, vector<32x128xf32>
      tpu.vector_store %arg7[%c0_11, %c0_12], %12 {strides = array<i32>} : memref<32x128xf32, #tpu.memory_space<vmem>>, vector<32x128xf32>,
    } else {
    }
    %c0 = arith.constant 0 : index
    %c0_1 = arith.constant 0 : index
    %3 = vector.load %arg7[%c0, %c0_1] : memref<32x128xf32, #tpu.memory_space<vmem>>, vector<32x128xf32>
    %c0_2 = arith.constant 0 : index
    %c0_3 = arith.constant 0 : index
    %4 = vector.load %arg3[%c0_2, %c0_3] : memref<32x128xbf16, #tpu.memory_space<vmem>>, vector<32x128xbf16>
    %c0_4 = arith.constant 0 : index
    %c0_5 = arith.constant 0 : index
    %5 = vector.load %arg4[%c0_4, %c0_5] : memref<128x128xbf16, #tpu.memory_space<vmem>>, vector<128x128xbf16>
    %cst = arith.constant dense<0.000000e+00> : vector<32x128xf32>
    %6 = tpu.matmul %4, %5, %cst {dimension_numbers = #tpu.dot_dimension_numbers<[1], [0], [0], [1], [0, 0, 1, 1], [], []>} : vector<32x128xbf16>, vector<128x128xbf16>, vector<32x128xf32> -> vector<32x128xf32>
    %7 = arith.addf %3, %6 : vector<32x128xf32>
    %c0_6 = arith.constant 0 : index
    %c0_7 = arith.constant 0 : index
    %8 = vector.load %arg7[%c0_6, %c0_7] : memref<32x128xf32, #tpu.memory_space<vmem>>, vector<32x128xf32>
    tpu.vector_store %arg7[%c0_6, %c0_7], %7 {strides = array<i32>} : memref<32x128xf32, #tpu.memory_space<vmem>>, vector<32x128xf32>,
    %c0_i32_8 = arith.constant 0 : i32
    %9 = arith.cmpi eq, %arg2, %c0_i32_8 : i32
    %10 = arith.extui %9 : i1 to i32
    %c0_i32_9 = arith.constant 0 : i32
    %11 = arith.cmpi ne, %10, %c0_i32_9 : i32
    scf.if %11 {
      %c0_10 = arith.constant 0 : index
      %c0_11 = arith.constant 0 : index
      %12 = vector.load %arg7[%c0_10, %c0_11] : memref<32x128xf32, #tpu.memory_space<vmem>>, vector<32x128xf32>
      %c0_12 = arith.constant 0 : index
      %c0_13 = arith.constant 0 : index
      %13 = vector.load %arg5[%c0_12, %c0_13] : memref<1x128xf32, #tpu.memory_space<vmem>>, vector<1x128xf32>
      %14 = vector.broadcast %13 : vector<1x128xf32> to vector<32x128xf32>
      %15 = arith.addf %12, %14 : vector<32x128xf32>
      %16 = arith.truncf %15 : vector<32x128xf32> to vector<32x128xbf16>
      %c0_14 = arith.constant 0 : index
      %c0_15 = arith.constant 0 : index
      %17 = vector.load %arg6[%c0_14, %c0_15] : memref<32x128xbf16, #tpu.memory_space<vmem>>, vector<32x128xbf16>
      tpu.vector_store %arg6[%c0_14, %c0_15], %16 {strides = array<i32>} : memref<32x128xbf16, #tpu.memory_space<vmem>>, vector<32x128xbf16>,
    } else {
    }
    return
  }
  func.func @transform_0(%arg0: i32, %arg1: i32, %arg2: i32) -> (i32, i32) {
    %c0_i32 = arith.constant 0 : i32
    return %arg0, %arg2 : i32, i32
  }
  func.func @transform_1(%arg0: i32, %arg1: i32, %arg2: i32) -> (i32, i32) {
    %c0_i32 = arith.constant 0 : i32
    return %arg2, %arg1 : i32, i32
  }
  func.func @transform_2(%arg0: i32, %arg1: i32, %arg2: i32) -> (i32, i32) {
    %c0_i32 = arith.constant 0 : i32
    %c0_i32_0 = arith.constant 0 : i32
    return %c0_i32, %arg1 : i32, i32
  }
  func.func @transform_3(%arg0: i32, %arg1: i32, %arg2: i32) -> (i32, i32) {
    %c0_i32 = arith.constant 0 : i32
    return %arg0, %arg1 : i32, i32
  }
}

</mosaic_0001>

<llo_original>
// kernel: tpu_custom_call.1
$region0: #{tpu_custom_call.1}
  #allocation0 [shape = 'u32[]', space=smem, size = 0x4, offset = 0x4, fixed_abs, tag = 'smem constant byte address 0x4 - core index']
  #allocation1 [shape = 'u32[72,128]{1,0:T(1,128)}', space=vmem, size = 0x9000, scoped, tag = 'internal scratch']
  #allocation2 [shape = 'f32[32,128]{1,0:T(8,128)}', space=vmem, size = 0x4000, scoped, tag = 'scratch operand']
  %s0 = inlined_call_operand.hbm [shape: bf16[32,128], index: 0, kind: input, shape index: {}]
  %s1 = inlined_call_operand.hbm [shape: bf16[128,128], index: 1, kind: input, shape index: {}]
  %s2 = inlined_call_operand.vmem [shape: f32[1,128], index: 2, kind: input, shape index: {}]
  %s3 = inlined_call_operand.hbm [shape: bf16[32,128], index: 3, kind: output, shape index: {}]
  %s4 = sld [smem:[#allocation0]]
  $region38: #{tpu_custom_call.1} parent=0
    _
  %s6 = ssub.s32 1, %s4
  %s7 = scalar_select 0, %s6, %s4
  $region1: #{tpu_custom_call.1} parent=0
    #allocation3 [shape = 'u8[8192]{0}', space=vmem, size = 0x2000, scoped, tag = 'input window, operand 0, single buffered']
    #allocation4 [shape = 's32[1]{0}', space=sflag, size = 0x4, scoped, tag = 'scoped memory for tpu_custom_call.1']
    #allocation5 [shape = 's32[1]{0}', space=sflag, size = 0x4, scoped, tag = 'scoped memory for tpu_custom_call.1']
    #allocation6 [shape = 'u8[32768]{0}', space=vmem, size = 0x8000, scoped, tag = 'input window, operand 1, single buffered']
    #allocation7 [shape = 's32[1]{0}', space=sflag, size = 0x4, scoped, tag = 'scoped memory for tpu_custom_call.1']
    #allocation8 [shape = 'u8[8192]{0}', space=vmem, size = 0x2000, scoped, tag = 'output window, operand 0, single buffered']
    %8 = vsyncpa [#allocation4], 0
    %9 = vsyncpa [#allocation7], 0
    %10 = vsyncpa [#allocation5], 0
    // Predicated region
    $region2: #{tpu_custom_call.1} parent=1 // pred_check
      _
    $region3: #{tpu_custom_call.1} parent=1 // pred_check_branch
      %12 = sbr.rel (0) target = $region5
    $region4: #{tpu_custom_call.1} parent=1 // pred_region
      %14 = vsyncadd [#allocation4], 0
      %s15 = sshll.u32 %s0, 4
      %s16 = int_to_ptr.hbm [resolvable:$true] %s15
      %s17 = sshll.u32 [#allocation3], 4
      %s18 = int_to_ptr.vmem [resolvable:$true] %s17
      %23 = dma.hbm_to_vmem [thread:$0]  %s16, 256, %s18, [#allocation4], 64, 64, 4
    $region5: #{tpu_custom_call.1} parent=1 // pred_fallthru
      _
    // Predicated region
    $region6: #{tpu_custom_call.1} parent=1 // pred_check
      _
    $region7: #{tpu_custom_call.1} parent=1 // pred_check_branch
      %25 = sbr.rel (0) target = $region9
    $region8: #{tpu_custom_call.1} parent=1 // pred_region
      %27 = vsyncadd [#allocation7], 0
      %s28 = sshll.u32 %s1, 4
      %s29 = int_to_ptr.hbm [resolvable:$true] %s28
      %s30 = sshll.u32 [#allocation6], 4
      %s31 = int_to_ptr.vmem [resolvable:$true] %s30
      %36 = dma.hbm_to_vmem [thread:$0]  %s29, 1024, %s31, [#allocation7], 64, 64, 4
    $region9: #{tpu_custom_call.1} parent=1 // pred_fallthru
      _
    // Predicated region
    $region10: #{tpu_custom_call.1} parent=1 // pred_check
      _
    $region11: #{tpu_custom_call.1} parent=1 // pred_check_branch
      %38 = sbr.rel (0) target = $region13
    $region12: #{tpu_custom_call.1} parent=1 // pred_region
      _
    $region13: #{tpu_custom_call.1} parent=1 // pred_fallthru
      _
    // Predicated region
    $region14: #{tpu_custom_call.1} parent=1 // pred_check
      _
    $region15: #{tpu_custom_call.1} parent=1 // pred_check_branch
      %40 = sbr.rel (0) target = $region17
    $region16: #{tpu_custom_call.1} parent=1 // pred_region
      %42 = dma.done [#allocation4], 256
    $region17: #{tpu_custom_call.1} parent=1 // pred_fallthru
      _
    // Predicated region
    $region18: #{tpu_custom_call.1} parent=1 // pred_check
      _
    $region19: #{tpu_custom_call.1} parent=1 // pred_check_branch
      %44 = sbr.rel (0) target = $region21
    $region20: #{tpu_custom_call.1} parent=1 // pred_region
      %46 = dma.done [#allocation7], 1024
    $region21: #{tpu_custom_call.1} parent=1 // pred_fallthru
      _
    %p47 = scmp.eq.s32.totalorder 0, 0
    // Predicated region
    $region22: #{tpu_custom_call.1} parent=1 // pred_check
      %p48 = pneg %p47
    $region23: #{tpu_custom_call.1} parent=1 // pred_check_branch
      %50 = sbr.rel (%p48) target = $region25
    $region24: #{tpu_custom_call.1} parent=1 // pred_region
      %51 = vst [vmem:[#allocation2] sm:$0xff] 0.0
      %52 = vst [vmem:[#allocation2 + $0x8] sm:$0xff] 0.0
      %53 = vst [vmem:[#allocation2 + $0x10] sm:$0xff] 0.0
      %54 = vst [vmem:[#allocation2 + $0x18] sm:$0xff] 0.0
    $region25: #{tpu_custom_call.1} parent=1 // pred_fallthru
      _
    %v55 = vld [vmem:[#allocation2] sm:$0xff]
    %v56 = vld [vmem:[#allocation2 + $0x8] sm:$0xff]
    %v57 = vld [vmem:[#allocation2 + $0x10] sm:$0xff]
    %v58 = vld [vmem:[#allocation2 + $0x18] sm:$0xff]
    %v59 = vld [vmem:[#allocation3] sm:$0xf]
    %v60 = vld [vmem:[#allocation3 + $0x4] sm:$0xf]
    %v61 = vld [vmem:[#allocation3 + $0x8] sm:$0xf]
    %v62 = vld [vmem:[#allocation3 + $0xc] sm:$0xf]
    %v63 = vld [vmem:[#allocation6] sm:$0xf]
    %v64 = vld [vmem:[#allocation6 + $0x4] sm:$0xf]
    %v65 = vld [vmem:[#allocation6 + $0x8] sm:$0xf]
    %v66 = vld [vmem:[#allocation6 + $0xc] sm:$0xf]
    %v67 = vld [vmem:[#allocation6 + $0x10] sm:$0xf]
    %v68 = vld [vmem:[#allocation6 + $0x14] sm:$0xf]
    %v69 = vld [vmem:[#allocation6 + $0x18] sm:$0xf]
    %v70 = vld [vmem:[#allocation6 + $0x1c] sm:$0xf]
    %v71 = vld [vmem:[#allocation6 + $0x20] sm:$0xf]
    %v72 = vld [vmem:[#allocation6 + $0x24] sm:$0xf]
    %v73 = vld [vmem:[#allocation6 + $0x28] sm:$0xf]
    %v74 = vld [vmem:[#allocation6 + $0x2c] sm:$0xf]
    %v75 = vld [vmem:[#allocation6 + $0x30] sm:$0xf]
    %v76 = vld [vmem:[#allocation6 + $0x34] sm:$0xf]
    %v77 = vld [vmem:[#allocation6 + $0x38] sm:$0xf]
    %v78 = vld [vmem:[#allocation6 + $0x3c] sm:$0xf]
    %v83 = vunpack.c.l.b16 %v59
    %v84 = vunpack.c.l.b16 %v60
    %v85 = vunpack.c.l.b16 %v61
    %v86 = vunpack.c.l.b16 %v62
    %v87 = vpack.c.b16 %v84, %v83
    %v88 = vpack.c.b16 %v86, %v85
    %v107 = vunpack.c.l.b16 %v63
    %v108 = vunpack.c.l.b16 %v64
    %v109 = vunpack.c.l.b16 %v65
    %v110 = vunpack.c.l.b16 %v66
    %v111 = vunpack.c.l.b16 %v67
    %v112 = vunpack.c.l.b16 %v68
    %v113 = vunpack.c.l.b16 %v69
    %v114 = vunpack.c.l.b16 %v70
    %v115 = vunpack.c.l.b16 %v71
    %v116 = vunpack.c.l.b16 %v72
    %v117 = vunpack.c.l.b16 %v73
    %v118 = vunpack.c.l.b16 %v74
    %v119 = vunpack.c.l.b16 %v75
    %v120 = vunpack.c.l.b16 %v76
    %v121 = vunpack.c.l.b16 %v77
    %v122 = vunpack.c.l.b16 %v78
    %v123 = vpack.c.b16 %v108, %v107
    %v124 = vpack.c.b16 %v110, %v109
    %v125 = vpack.c.b16 %v112, %v111
    %v126 = vpack.c.b16 %v114, %v113
    %v127 = vpack.c.b16 %v116, %v115
    %v128 = vpack.c.b16 %v118, %v117
    %v129 = vpack.c.b16 %v120, %v119
    %v130 = vpack.c.b16 %v122, %v121
    %139 = vmatpush.bf16.msra.mxu0 %v130
    %140 = vmatpush.bf16.msra.mxu0 %v129
    %141 = vmatpush.bf16.msra.mxu0 %v128
    %142 = vmatpush.bf16.msra.mxu0 %v127
    %143 = vmatpush.bf16.msra.mxu0 %v126
    %144 = vmatpush.bf16.msra.mxu0 %v125
    %145 = vmatpush.bf16.msra.mxu0 %v124
    %146 = vmatpush.bf16.msra.mxu0 %v123
    %147 = vmatmul.bf16.gmra.mxu0 %v87
    %v148 = vpop.f32.mrf.mxu0
    %v149 = vadd.f32 0.0, %v148
    %v150 = vpop.f32.mrf.mxu0
    %v151 = vadd.f32 0.0, %v150
    %152 = vmatmul.bf16.gmra.mxu0 %v88
    %v153 = vpop.f32.mrf.mxu0
    %v154 = vadd.f32 0.0, %v153
    %v155 = vpop.f32.mrf.mxu0
    %v156 = vadd.f32 0.0, %v155
    %157 = vdwg.mxu0
    %v158 = vadd.f32 %v55, %v149
    %v159 = vadd.f32 %v56, %v151
    %v160 = vadd.f32 %v57, %v154
    %v161 = vadd.f32 %v58, %v156
    %162 = vst [vmem:[#allocation2] sm:$0xff] %v158
    %163 = vst [vmem:[#allocation2 + $0x8] sm:$0xff] %v159
    %164 = vst [vmem:[#allocation2 + $0x10] sm:$0xff] %v160
    %165 = vst [vmem:[#allocation2 + $0x18] sm:$0xff] %v161
    // Predicated region
    $region26: #{tpu_custom_call.1} parent=1 // pred_check
      %p166 = pneg %p47
    $region27: #{tpu_custom_call.1} parent=1 // pred_check_branch
      %168 = sbr.rel (%p166) target = $region29
    $region28: #{tpu_custom_call.1} parent=1 // pred_region
      %v169 = vld [vmem:[#allocation2] sm:$0xff]
      %v170 = vld [vmem:[#allocation2 + $0x8] sm:$0xff]
      %v171 = vld [vmem:[#allocation2 + $0x10] sm:$0xff]
      %v172 = vld [vmem:[#allocation2 + $0x18] sm:$0xff]
      %v173 = vld [vmem:[%s2] sm:$0x1]
      %v175 = vperm.slane %v173, 0
      %v177 = vadd.f32 %v169, %v175
      %v178 = vadd.f32 %v170, %v175
      %v179 = vadd.f32 %v171, %v175
      %v180 = vadd.f32 %v172, %v175
      %v181 = vpack.c.bf16 %v177, %v177
      %v182 = vpack.c.bf16 %v178, %v178
      %v183 = vpack.c.bf16 %v179, %v179
      %v184 = vpack.c.bf16 %v180, %v180
      %185 = vst [vmem:[#allocation8] sm:$0xf] %v181
      %186 = vst [vmem:[#allocation8 + $0x4] sm:$0xf] %v182
      %187 = vst [vmem:[#allocation8 + $0x8] sm:$0xf] %v183
      %188 = vst [vmem:[#allocation8 + $0xc] sm:$0xf] %v184
    $region29: #{tpu_custom_call.1} parent=1 // pred_fallthru
      _
    // Predicated region
    $region30: #{tpu_custom_call.1} parent=1 // pred_check
      _
    $region31: #{tpu_custom_call.1} parent=1 // pred_check_branch
      %190 = sbr.rel (0) target = $region33
    $region32: #{tpu_custom_call.1} parent=1 // pred_region
      %192 = vsyncadd [#allocation5], 0
      %s193 = sshll.u32 [#allocation8], 4
      %s194 = int_to_ptr.vmem [resolvable:$true] %s193
      %s195 = sshll.u32 %s3, 4
      %s196 = int_to_ptr.hbm [resolvable:$true] %s195
      %201 = dma.vmem_to_hbm [thread:$0]  %s194, 256, %s196, [#allocation5], 64, 64, 4
    $region33: #{tpu_custom_call.1} parent=1 // pred_fallthru
      _
    // Predicated region
    $region34: #{tpu_custom_call.1} parent=1 // pred_check
      _
    $region35: #{tpu_custom_call.1} parent=1 // pred_check_branch
      %203 = sbr.rel (0) target = $region37
    $region36: #{tpu_custom_call.1} parent=1 // pred_region
      %205 = dma.done [#allocation5], 256
    $region37: #{tpu_custom_call.1} parent=1 // pred_fallthru
      _
    %206 = vsyncpa [#allocation4], 1
    %207 = vsyncpa [#allocation7], 1
    %208 = vsyncpa [#allocation5], 1

</llo_original>
